<compile_context>
chip_gen: v5e
topology: v5e:2x2
jax: 0.10.0
libtpu: 0.0.40
codegen_flags: <defaults>
</compile_context>

<pallas_src>
import jax
import jax.numpy as jnp
from jax.experimental import pallas as pl
from jax.experimental.pallas import tpu as pltpu


def _perm_matmul_kernel(x_ref, e_ref, o_ref):
    # out[b, j] = sum_i x[b, i] * E[i, j] = x[b, perm[j]]
    # One-hot E makes the MXU f32 accumulation exact (each output element is
    # a single x value times 1.0).
    o_ref[...] = jnp.dot(
        x_ref[...], e_ref[...], preferred_element_type=jnp.float32
    ).astype(o_ref.dtype)


def perm_matmul(x, e, *, tile_b=128):
    """Compute x @ e with a Pallas kernel, tiling the batch axis.

    x: [B, C], e: [C, C] one-hot permutation matrix (same dtype as x).
    """
    B, C = x.shape
    tile_b = min(tile_b, B)
    grid = (pl.cdiv(B, tile_b),)

    return pl.pallas_call(
        _perm_matmul_kernel,
        out_shape=jax.ShapeDtypeStruct((B, C), x.dtype),
        grid_spec=pl.GridSpec(
            grid=grid,
            in_specs=[
                # x: one batch tile per grid step (pipelined HBM<->VMEM DMA).
                pl.BlockSpec((tile_b, C), lambda i: (i, 0)),
                # E: constant index_map -> loaded once, VMEM-resident across
                # the whole grid.
                pl.BlockSpec((C, C), lambda i: (0, 0)),
            ],
            out_specs=pl.BlockSpec((tile_b, C), lambda i: (i, 0)),
        ),
        compiler_params=pltpu.CompilerParams(
            # Batch tiles are independent -> shard across TensorCores (v7x).
            dimension_semantics=("parallel",),
        ),
    )(x, e)


class Perm:
    """JAX/Pallas port of the PyTorch Perm flow layer."""

    def __init__(self, nvars, perm=None, *, key=None, dtype=jnp.float32):
        if perm is None:
            if key is None:
                key = jax.random.PRNGKey(0)
            perm = jax.random.permutation(key, nvars)
        self.perm = jnp.asarray(perm)
        self.reverse_perm = jnp.argsort(self.perm)
        # One-hot permutation matrix, built ONCE (hoisted out of the hot path).
        # Values are exactly 0/1, so a bf16 E (for bf16 activations) is exact
        # and halves the VMEM footprint / doubles MXU throughput.
        eye = jnp.arange(nvars)
        self._e = (eye[:, None] == self.perm[None, :]).astype(dtype)   # fwd
        self._e_inv = self._e.T                                        # inv

    def _e_for(self, x, e):
        # Trace-time dtype match; no-op when dtypes already agree.
        return e if e.dtype == x.dtype else e.astype(x.dtype)

    def forward(self, x, context=None):
        y = perm_matmul(x, self._e_for(x, self._e))
        # Permutation has zero log-det; return a traced scalar zero so it
        # composes under jit/vmap/grad (PyTorch module returns plain 0).
        return y, jnp.zeros((), x.dtype)

    def invert(self, x, context=None):
        # x @ E.T == x[:, argsort(perm)]
        return perm_matmul(x, self._e_for(x, self._e_inv))


if __name__ == "__main__":
    key = jax.random.PRNGKey(0)
    kx, kp, kx2 = jax.random.split(key, 3)

    # --- Small shapes consistent with the module (batch=8, nvars=32) ---
    B, nvars = 8, 32
    x = jax.random.normal(kx, (B, nvars), dtype=jnp.float32)
    perm = jax.random.permutation(kp, nvars)

    layer = Perm(nvars, perm=perm)

    y, logdet = layer.forward(x, context=None)
    y = jax.block_until_ready(y)

    ref = x[:, perm]
    assert jnp.allclose(logdet, 0.0), "logdet must be zero"
    assert jnp.allclose(y, ref), "forward mismatch vs reference gather"

    x_back = jax.block_until_ready(layer.invert(y, context=None))
    assert jnp.allclose(x_back, x), "invert did not round-trip"

    # --- Slightly larger shape to exercise the tiled / multi-block path ---
    B2, nvars2 = 256, 128  # 2 batch tiles of 128, lane-aligned C
    x2 = jax.random.normal(kx2, (B2, nvars2), dtype=jnp.float32)
    layer2 = Perm(nvars2, key=kp)
    y2, _ = layer2.forward(x2, context=None)
    y2 = jax.block_until_ready(y2)
    assert jnp.allclose(y2, x2[:, layer2.perm]), "tiled forward mismatch"
    x2_back = jax.block_until_ready(layer2.invert(y2, context=None))
    assert jnp.allclose(x2_back, x2), "tiled invert did not round-trip"

    print("KERNEL_OK")
</pallas_src>

<mosaic_0001>
module attributes {stable_mosaic.version = 11 : i64} {
  func.func @_perm_matmul_kernel(%arg0: i32, %arg1: memref<8x32xf32, #tpu.memory_space<vmem>>, %arg2: memref<32x32xf32, #tpu.memory_space<vmem>>, %arg3: memref<8x32xf32, #tpu.memory_space<vmem>>) attributes {dimension_semantics = [#tpu.dimension_semantics<parallel>], iteration_bounds = array<i64: 1>, scalar_prefetch = 0 : i64, scratch_operands = 0 : i64, tpu.core_type = #tpu.core_type<tc>, window_params = [{transform_indices = @transform_0, window_bounds = array<i64: 8, 32>}, {pipeline_mode = #tpu.pipeline_mode<synchronous>, transform_indices = @transform_1, window_bounds = array<i64: 32, 32>}, {transform_indices = @transform_2, window_bounds = array<i64: 8, 32>}]} {
    %c0 = arith.constant 0 : index
    %c0_0 = arith.constant 0 : index
    %0 = vector.load %arg1[%c0, %c0_0] : memref<8x32xf32, #tpu.memory_space<vmem>>, vector<8x32xf32>
    %c0_1 = arith.constant 0 : index
    %c0_2 = arith.constant 0 : index
    %1 = vector.load %arg2[%c0_1, %c0_2] : memref<32x32xf32, #tpu.memory_space<vmem>>, vector<32x32xf32>
    %cst = arith.constant dense<0.000000e+00> : vector<8x32xf32>
    %2 = tpu.matmul %0, %1, %cst {dimension_numbers = #tpu.dot_dimension_numbers<[1], [0], [0], [1], [0, 0, 1, 1], [], []>} : vector<8x32xf32>, vector<32x32xf32>, vector<8x32xf32> -> vector<8x32xf32>
    %c0_3 = arith.constant 0 : index
    %c0_4 = arith.constant 0 : index
    %3 = vector.load %arg3[%c0_3, %c0_4] : memref<8x32xf32, #tpu.memory_space<vmem>>, vector<8x32xf32>
    tpu.vector_store %arg3[%c0_3, %c0_4], %2 {strides = array<i32>} : memref<8x32xf32, #tpu.memory_space<vmem>>, vector<8x32xf32>,
    return
  }
  func.func @transform_0(%arg0: i32) -> (i32, i32) {
    %c0_i32 = arith.constant 0 : i32
    %c0_i32_0 = arith.constant 0 : i32
    return %arg0, %c0_i32 : i32, i32
  }
  func.func @transform_1(%arg0: i32) -> (i32, i32) {
    %c0_i32 = arith.constant 0 : i32
    %c0_i32_0 = arith.constant 0 : i32
    %c0_i32_1 = arith.constant 0 : i32
    return %c0_i32, %c0_i32_0 : i32, i32
  }
  func.func @transform_2(%arg0: i32) -> (i32, i32) {
    %c0_i32 = arith.constant 0 : i32
    %c0_i32_0 = arith.constant 0 : i32
    return %arg0, %c0_i32 : i32, i32
  }
}

</mosaic_0001>

<llo_original>
// kernel: tpu_custom_call.1
$region0: #{tpu_custom_call.1}
  #allocation0 [shape = 'u32[]', space=smem, size = 0x4, offset = 0x4, fixed_abs, tag = 'smem constant byte address 0x4 - core index']
  #allocation1 [shape = 'u32[72,128]{1,0:T(1,128)}', space=vmem, size = 0x9000, scoped, tag = 'internal scratch']
  %s0 = inlined_call_operand.hbm [shape: f32[8,32], index: 0, kind: input, shape index: {}]
  %s1 = inlined_call_operand.hbm [shape: f32[32,32], index: 1, kind: input, shape index: {}]
  %s2 = inlined_call_operand.hbm [shape: f32[8,32], index: 2, kind: output, shape index: {}]
  %s3 = sld [smem:[#allocation0]]
  $region26: #{tpu_custom_call.1} parent=0
    _
  %s5 = ssub.s32 1, %s3
  %s6 = scalar_select 0, %s5, %s3
  $region1: #{tpu_custom_call.1} parent=0
    #allocation2 [shape = 'u8[4096]{0}', space=vmem, size = 0x1000, scoped, tag = 'input window, operand 0, single buffered']
    #allocation3 [shape = 's32[1]{0}', space=sflag, size = 0x4, scoped, tag = 'scoped memory for tpu_custom_call.1']
    #allocation4 [shape = 's32[1]{0}', space=sflag, size = 0x4, scoped, tag = 'scoped memory for tpu_custom_call.1']
    #allocation5 [shape = 'u8[16384]{0}', space=vmem, size = 0x4000, scoped, tag = 'input window, operand 1, single buffered']
    #allocation6 [shape = 's32[1]{0}', space=sflag, size = 0x4, scoped, tag = 'scoped memory for tpu_custom_call.1']
    #allocation7 [shape = 'u8[4096]{0}', space=vmem, size = 0x1000, scoped, tag = 'output window, operand 0, single buffered']
    %7 = vsyncpa [#allocation3], 0
    %8 = vsyncpa [#allocation6], 0
    %9 = vsyncpa [#allocation4], 0
    // Predicated region
    $region2: #{tpu_custom_call.1} parent=1 // pred_check
      _
    $region3: #{tpu_custom_call.1} parent=1 // pred_check_branch
      %11 = sbr.rel (0) target = $region5
    $region4: #{tpu_custom_call.1} parent=1 // pred_region
      %13 = vsyncadd [#allocation3], 0
      %s15 = sshll.u32 %s0, 4
      %s16 = int_to_ptr.hbm [resolvable:$true] %s15
      %s17 = sshll.u32 [#allocation2], 4
      %s18 = int_to_ptr.vmem [resolvable:$true] %s17
      %20 = dma.hbm_to_vmem [thread:$0]  %s16, 128, %s18, [#allocation3]
    $region5: #{tpu_custom_call.1} parent=1 // pred_fallthru
      _
    // Predicated region
    $region6: #{tpu_custom_call.1} parent=1 // pred_check
      _
    $region7: #{tpu_custom_call.1} parent=1 // pred_check_branch
      %22 = sbr.rel (0) target = $region9
    $region8: #{tpu_custom_call.1} parent=1 // pred_region
      %24 = vsyncadd [#allocation6], 0
      %s25 = sshll.u32 %s1, 4
      %s26 = int_to_ptr.hbm [resolvable:$true] %s25
      %s27 = sshll.u32 [#allocation5], 4
      %s28 = int_to_ptr.vmem [resolvable:$true] %s27
      %33 = dma.hbm_to_vmem [thread:$0]  %s26, 512, %s28, [#allocation6], 128, 128, 8
    $region9: #{tpu_custom_call.1} parent=1 // pred_fallthru
      _
    // Predicated region
    $region10: #{tpu_custom_call.1} parent=1 // pred_check
      _
    $region11: #{tpu_custom_call.1} parent=1 // pred_check_branch
      %35 = sbr.rel (0) target = $region13
    $region12: #{tpu_custom_call.1} parent=1 // pred_region
      %37 = dma.done [#allocation3], 128
    $region13: #{tpu_custom_call.1} parent=1 // pred_fallthru
      _
    // Predicated region
    $region14: #{tpu_custom_call.1} parent=1 // pred_check
      _
    $region15: #{tpu_custom_call.1} parent=1 // pred_check_branch
      %39 = sbr.rel (0) target = $region17
    $region16: #{tpu_custom_call.1} parent=1 // pred_region
      %41 = dma.done [#allocation6], 512
    $region17: #{tpu_custom_call.1} parent=1 // pred_fallthru
      _
    %v42 = vld [vmem:[#allocation2] sm:$0xff]
    %v43 = vld [vmem:[#allocation5] sm:$0xff]
    %v44 = vld [vmem:[#allocation5 + $0x8] sm:$0xff]
    %v45 = vld [vmem:[#allocation5 + $0x10] sm:$0xff]
    %v46 = vld [vmem:[#allocation5 + $0x18] sm:$0xff]
    %vm47 = vcmask 261120
    %v49 = vsel %vm47, %v42, 0
    %51 = vmatpush.msra.mxu0 0.0
    %52 = vmatpush.msra.mxu0 0.0
    %53 = vmatpush.msra.mxu0 0.0
    %54 = vmatpush.msra.mxu0 0.0
    %55 = vmatpush.msra.mxu0 0.0
    %56 = vmatpush.msra.mxu0 0.0
    %57 = vmatpush.msra.mxu0 0.0
    %58 = vmatpush.msra.mxu0 0.0
    %59 = vmatpush.msra.mxu0 0.0
    %60 = vmatpush.msra.mxu0 0.0
    %61 = vmatpush.msra.mxu0 0.0
    %62 = vmatpush.msra.mxu0 0.0
    %63 = vmatpush.msra.mxu0 %v46
    %64 = vmatpush.msra.mxu0 %v45
    %65 = vmatpush.msra.mxu0 %v44
    %66 = vmatpush.msra.mxu0 %v43
    %67 = vmatmul.f32.gmra.mxu0 %v49
    %v68 = vpop.f32.mrf.mxu0
    %v69 = vadd.f32 0.0, %v68
    %70 = vdwg.mxu0
    %71 = vst.msk [vmem:[#allocation7] sm:$0xff] %vm47, %v69
    // Predicated region
    $region18: #{tpu_custom_call.1} parent=1 // pred_check
      _
    $region19: #{tpu_custom_call.1} parent=1 // pred_check_branch
      %73 = sbr.rel (0) target = $region21
    $region20: #{tpu_custom_call.1} parent=1 // pred_region
      %75 = vsyncadd [#allocation4], 0
      %s77 = sshll.u32 [#allocation7], 4
      %s78 = int_to_ptr.vmem [resolvable:$true] %s77
      %s79 = sshll.u32 %s2, 4
      %s80 = int_to_ptr.hbm [resolvable:$true] %s79
      %82 = dma.vmem_to_hbm [thread:$0]  %s78, 128, %s80, [#allocation4]
    $region21: #{tpu_custom_call.1} parent=1 // pred_fallthru
      _
    // Predicated region
    $region22: #{tpu_custom_call.1} parent=1 // pred_check
      _
    $region23: #{tpu_custom_call.1} parent=1 // pred_check_branch
      %84 = sbr.rel (0) target = $region25
    $region24: #{tpu_custom_call.1} parent=1 // pred_region
      %86 = dma.done [#allocation4], 128
    $region25: #{tpu_custom_call.1} parent=1 // pred_fallthru
      _
    %87 = vsyncpa [#allocation3], 1
    %88 = vsyncpa [#allocation6], 1
    %89 = vsyncpa [#allocation4], 1

</llo_original>
